<compile_context>
chip_gen: v6e
topology: v6e:2x2x1
jax: 0.10.0
libtpu: 0.0.40
codegen_flags: <defaults>
</compile_context>

<pallas_src>
import jax
import jax.numpy as jnp
from jax import lax
from jax.experimental import pallas as pl
from jax.experimental.pallas import tpu as pltpu

_R = 2  # PixelShuffle upscale factor


def _conv3x3_banded_kernel(x_ref, w_ref, o_ref, xpad_ref):
    """3x3 'same' conv for one batch element as 3 banded MXU matmuls.

    x_ref:    (1, H, W*Cin)        input rows, (w, ci) fused into lanes
    w_ref:    (3, W*Cin, W*Cout)   banded weights, whole array resident in VMEM
    o_ref:    (1, H, W*Cout)       lane-dense conv output, lanes ordered (rh, c2, w, rw)
    xpad_ref: (H+2, W*Cin) VMEM    staging buffer with one zero row above/below
    """
    H = x_ref.shape[1]
    x = x_ref[0]                                            # (H, W*Cin)

    # Center band (dy=1) reads the unpadded rows directly -> biggest matmul starts
    # immediately, independent of the staging copy below.
    acc = jnp.dot(x, w_ref[1], preferred_element_type=jnp.float32)

    # In-kernel padding=1 along H: zero rows above/below, image rows in between.
    # (Left/right zero padding is absorbed by the banded weights, see _banded_weights.)
    # Unconditional on purpose (see header note about parallel grid axes + per-core scratch).
    zero_row = jnp.zeros((1, x_ref.shape[2]), dtype=xpad_ref.dtype)
    xpad_ref[0:1, :] = zero_row
    xpad_ref[H + 1:H + 2, :] = zero_row
    xpad_ref[1:H + 1, :] = x

    # Top (dy=0) and bottom (dy=2) bands from the staged, row-padded copy.
    acc = acc + jnp.dot(xpad_ref[0:H, :], w_ref[0], preferred_element_type=jnp.float32)
    acc = acc + jnp.dot(xpad_ref[2:H + 2, :], w_ref[2], preferred_element_type=jnp.float32)

    # Single lane-dense store (last dim W*Cout; keep a multiple of 128 at non-demo shapes).
    o_ref[...] = acc[None].astype(o_ref.dtype)


def _conv3x3_banded(x_fused, wband, out_dtype):
    """x_fused: (B, H, W*Cin); wband: (3, W*Cin, W*Cout) -> (B, H, W*Cout)."""
    B, H, WCin = x_fused.shape
    WCout = wband.shape[-1]

    def _isz(d):
        return jnp.dtype(d).itemsize

    cost = pl.CostEstimate(
        flops=2 * B * H * 3 * WCin * WCout,
        transcendentals=0,
        bytes_accessed=(B * H * WCin * _isz(x_fused.dtype)
                        + 3 * WCin * WCout * _isz(wband.dtype)
                        + B * H * WCout * _isz(out_dtype)),
    )

    return pl.pallas_call(
        _conv3x3_banded_kernel,
        out_shape=jax.ShapeDtypeStruct((B, H, WCout), out_dtype),
        grid_spec=pltpu.PrefetchScalarGridSpec(
            num_scalar_prefetch=0,
            grid=(B,),
            in_specs=[
                pl.BlockSpec((1, H, WCin), lambda b: (b, 0, 0)),
                # Grid-invariant band weight: one resident VMEM copy, no per-step DMA
                # bookkeeping and no double-buffer allocation.
                pl.BlockSpec(memory_space=pltpu.MemorySpace.VMEM),
            ],
            out_specs=pl.BlockSpec((1, H, WCout), lambda b: (b, 0, 0)),
            scratch_shapes=[pltpu.VMEM((H + 2, WCin), x_fused.dtype)],
        ),
        compiler_params=pltpu.CompilerParams(
            dimension_semantics=("parallel",)),
        cost_estimate=cost,
    )(x_fused, wband)


def _banded_weights(weight_oihw, W, dtype, r=_R):
    """OIHW 3x3 weights -> (3, W*Cin, W*Cout) banded slabs, one per kernel row dy.

    band[dy, wi*Cin+ci, L] = weight[co, ci, dy, dx]  where  wi == w + dx - 1  and the
    output-lane index L is ordered as (rh, c2, w, rw) — a free (weight-prep time)
    permutation of PyTorch's co = (c2, rh, rw) that makes the wrapper's PixelShuffle fold
    move W*r-element contiguous runs.  Rows that would index the left/right zero padding
    simply do not appear, which is equivalent to multiplying by the zero pad.
    """
    Cout, Cin, KH, KW = weight_oihw.shape
    C2 = Cout // (r * r)
    w_taps = jnp.transpose(weight_oihw, (2, 3, 1, 0))            # (dy, dx, Cin, Cout)
    # S[dx, wi, w] = 1 iff wi == w + dx - 1  (padding=1 along W)
    S = jnp.stack([jnp.eye(W, W, k=1 - dx, dtype=weight_oihw.dtype)
                   for dx in range(KW)])
    band = jnp.einsum('xab,yxcd->yacbd', S, w_taps)              # (dy, wi, ci, w, co)
    band = band.reshape(KH, W, Cin, W, C2, r, r)                 # (dy, wi, ci, w, c2, rh, rw)
    band = jnp.transpose(band, (0, 1, 2, 5, 4, 3, 6))            # (dy, wi, ci, rh, c2, w, rw)
    return band.reshape(KH, W * Cin, W * Cout).astype(dtype)


def upsample_forward(x_nchw, weight_oihw, *, compute_dtype=jnp.bfloat16):
    """Equivalent of Upsample.forward (Conv2d 3x3 pad=1 no-bias -> PixelShuffle(2)).

    x_nchw:      (B, n_feat, H, W)
    weight_oihw: (2*n_feat, n_feat, 3, 3)   (PyTorch Conv2d weight layout)
    returns:     (B, n_feat // 2, 2H, 2W), dtype of x_nchw
    """
    B, Cin, H, W = x_nchw.shape
    Cout = weight_oihw.shape[0]
    r = _R
    C2 = Cout // (r * r)

    # One input layout pass: cast FIRST (so the transpose moves bf16, not f32), then
    # NCHW -> NHWC; the trailing reshape fusing (w, ci) into lanes is free (contiguous).
    x_fused = (jnp.transpose(x_nchw.astype(compute_dtype), (0, 2, 3, 1))
               .reshape(B, H, W * Cin))
    wband = _banded_weights(weight_oihw, W, compute_dtype)

    y = _conv3x3_banded(x_fused, wband, out_dtype=x_nchw.dtype)   # (B, H, W*Cout)

    # PixelShuffle(2) + NHWC->NCHW folded into ONE transpose whose innermost contiguous
    # run is W*r elements (the (rh, c2, w, rw) lane order was baked into the band).
    y = y.reshape(B, H, r, C2, W * r)
    y = jnp.transpose(y, (0, 3, 1, 2, 4))                         # (B, C2, H, r, W*r)
    return y.reshape(B, C2, H * r, W * r)


# ----------------------------- reference (pure JAX) -----------------------------

def _pixel_shuffle_nchw(x_nchw, r):
    B, C, H, W = x_nchw.shape
    C2 = C // (r * r)
    x = x_nchw.reshape(B, C2, r, r, H, W)
    x = jnp.transpose(x, (0, 1, 4, 2, 5, 3))
    return x.reshape(B, C2, H * r, W * r)


def _reference_forward(x_nchw, weight_oihw):
    y = lax.conv_general_dilated(
        x_nchw, weight_oihw,
        window_strides=(1, 1),
        padding=((1, 1), (1, 1)),
        dimension_numbers=("NCHW", "OIHW", "NCHW"))
    return _pixel_shuffle_nchw(y, 2)


if __name__ == "__main__":
    key = jax.random.PRNGKey(0)
    kx, kw = jax.random.split(key)

    B, n_feat, H, W = 2, 4, 16, 16
    x = jax.random.normal(kx, (B, n_feat, H, W), dtype=jnp.float32)
    # Conv2d(n_feat, 2*n_feat, 3, padding=1, bias=False) weight, deterministic init
    fan_in = n_feat * 3 * 3
    weight = jax.random.normal(kw, (2 * n_feat, n_feat, 3, 3),
                               dtype=jnp.float32) * (1.0 / fan_in) ** 0.5

    ref = jax.block_until_ready(_reference_forward(x, weight))

    # f32-operand path.  Tolerance covers the TPU default (possibly reduced-precision)
    # MXU matmul/conv lowering while still catching any structural/banding bug (O(1) errors).
    out_f32 = jax.block_until_ready(
        upsample_forward(x, weight, compute_dtype=jnp.float32))
    assert out_f32.shape == (B, n_feat // 2, 2 * H, 2 * W), out_f32.shape
    assert jnp.allclose(out_f32, ref, atol=5e-2, rtol=5e-2), \
        float(jnp.max(jnp.abs(out_f32 - ref)))

    # Default fast path (bf16 operands, f32 accumulation) -> loose tolerance.
    out = jax.block_until_ready(upsample_forward(x, weight))
    assert out.shape == (B, n_feat // 2, 2 * H, 2 * W), out.shape
    assert jnp.allclose(out, ref, atol=1e-1, rtol=1e-1), \
        float(jnp.max(jnp.abs(out - ref)))

    print("KERNEL_OK")
</pallas_src>

<mosaic_0001>
module attributes {stable_mosaic.version = 11 : i64} {
  func.func @_conv3x3_banded_kernel(%arg0: i32, %arg1: memref<1x16x64xf32, #tpu.memory_space<vmem>>, %arg2: memref<3x64x128xf32, #tpu.memory_space<vmem>>, %arg3: memref<1x16x128xf32, #tpu.memory_space<vmem>>, %arg4: memref<18x64xf32, #tpu.memory_space<vmem>>) attributes {dimension_semantics = [#tpu.dimension_semantics<parallel>], iteration_bounds = array<i64: 2>, scalar_prefetch = 0 : i64, scratch_operands = 1 : i64, tpu.core_type = #tpu.core_type<tc>, window_params = [{transform_indices = @transform_0, window_bounds = array<i64: 1, 16, 64>}, {pipeline_mode = #tpu.pipeline_mode<synchronous>, transform_indices = @transform_1, window_bounds = array<i64: 3, 64, 128>}, {transform_indices = @transform_2, window_bounds = array<i64: 1, 16, 128>}]} {
    %c0 = arith.constant 0 : index
    %c0_0 = arith.constant 0 : index
    %c0_1 = arith.constant 0 : index
    %0 = vector.load %arg1[%c0, %c0_0, %c0_1] : memref<1x16x64xf32, #tpu.memory_space<vmem>>, vector<1x16x64xf32>
    %1 = vector.shape_cast %0 : vector<1x16x64xf32> to vector<16x64xf32>
    %c1 = arith.constant 1 : index
    %c0_2 = arith.constant 0 : index
    %c0_3 = arith.constant 0 : index
    %2 = vector.load %arg2[%c1, %c0_2, %c0_3] : memref<3x64x128xf32, #tpu.memory_space<vmem>>, vector<1x64x128xf32>
    %3 = vector.shape_cast %2 : vector<1x64x128xf32> to vector<64x128xf32>
    %cst = arith.constant dense<0.000000e+00> : vector<16x128xf32>
    %4 = tpu.matmul %1, %3, %cst {dimension_numbers = #tpu.dot_dimension_numbers<[1], [0], [0], [1], [0, 0, 1, 1], [], []>} : vector<16x64xf32>, vector<64x128xf32>, vector<16x128xf32> -> vector<16x128xf32>
    %cst_4 = arith.constant 0.000000e+00 : f32
    %5 = vector.broadcast %cst_4 : f32 to vector<1x64xf32>
    %c0_5 = arith.constant 0 : index
    %c0_6 = arith.constant 0 : index
    %6 = vector.load %arg4[%c0_5, %c0_6] : memref<18x64xf32, #tpu.memory_space<vmem>>, vector<1x64xf32>
    tpu.vector_store %arg4[%c0_5, %c0_6], %5 {strides = array<i32>} : memref<18x64xf32, #tpu.memory_space<vmem>>, vector<1x64xf32>,
    %c17 = arith.constant 17 : index
    %c0_7 = arith.constant 0 : index
    %7 = vector.load %arg4[%c17, %c0_7] : memref<18x64xf32, #tpu.memory_space<vmem>>, vector<1x64xf32>
    tpu.vector_store %arg4[%c17, %c0_7], %5 {strides = array<i32>} : memref<18x64xf32, #tpu.memory_space<vmem>>, vector<1x64xf32>,
    %c1_8 = arith.constant 1 : index
    %c0_9 = arith.constant 0 : index
    %8 = vector.load %arg4[%c1_8, %c0_9] : memref<18x64xf32, #tpu.memory_space<vmem>>, vector<16x64xf32>
    tpu.vector_store %arg4[%c1_8, %c0_9], %1 {strides = array<i32>} : memref<18x64xf32, #tpu.memory_space<vmem>>, vector<16x64xf32>,
    %c0_10 = arith.constant 0 : index
    %c0_11 = arith.constant 0 : index
    %9 = vector.load %arg4[%c0_10, %c0_11] : memref<18x64xf32, #tpu.memory_space<vmem>>, vector<16x64xf32>
    %c0_12 = arith.constant 0 : index
    %c0_13 = arith.constant 0 : index
    %c0_14 = arith.constant 0 : index
    %10 = vector.load %arg2[%c0_12, %c0_13, %c0_14] : memref<3x64x128xf32, #tpu.memory_space<vmem>>, vector<1x64x128xf32>
    %11 = vector.shape_cast %10 : vector<1x64x128xf32> to vector<64x128xf32>
    %cst_15 = arith.constant dense<0.000000e+00> : vector<16x128xf32>
    %12 = tpu.matmul %9, %11, %cst_15 {dimension_numbers = #tpu.dot_dimension_numbers<[1], [0], [0], [1], [0, 0, 1, 1], [], []>} : vector<16x64xf32>, vector<64x128xf32>, vector<16x128xf32> -> vector<16x128xf32>
    %13 = arith.addf %4, %12 : vector<16x128xf32>
    %c2 = arith.constant 2 : index
    %c0_16 = arith.constant 0 : index
    %14 = vector.load %arg4[%c2, %c0_16] : memref<18x64xf32, #tpu.memory_space<vmem>>, vector<16x64xf32>
    %c2_17 = arith.constant 2 : index
    %c0_18 = arith.constant 0 : index
    %c0_19 = arith.constant 0 : index
    %15 = vector.load %arg2[%c2_17, %c0_18, %c0_19] : memref<3x64x128xf32, #tpu.memory_space<vmem>>, vector<1x64x128xf32>
    %16 = vector.shape_cast %15 : vector<1x64x128xf32> to vector<64x128xf32>
    %cst_20 = arith.constant dense<0.000000e+00> : vector<16x128xf32>
    %17 = tpu.matmul %14, %16, %cst_20 {dimension_numbers = #tpu.dot_dimension_numbers<[1], [0], [0], [1], [0, 0, 1, 1], [], []>} : vector<16x64xf32>, vector<64x128xf32>, vector<16x128xf32> -> vector<16x128xf32>
    %18 = arith.addf %13, %17 : vector<16x128xf32>
    %19 = vector.shape_cast %18 : vector<16x128xf32> to vector<1x16x128xf32>
    %c0_21 = arith.constant 0 : index
    %c0_22 = arith.constant 0 : index
    %c0_23 = arith.constant 0 : index
    %20 = vector.load %arg3[%c0_21, %c0_22, %c0_23] : memref<1x16x128xf32, #tpu.memory_space<vmem>>, vector<1x16x128xf32>
    tpu.vector_store %arg3[%c0_21, %c0_22, %c0_23], %19 {strides = array<i32>} : memref<1x16x128xf32, #tpu.memory_space<vmem>>, vector<1x16x128xf32>,
    return
  }
  func.func @transform_0(%arg0: i32) -> (i32, i32, i32) {
    %c0_i32 = arith.constant 0 : i32
    %c0_i32_0 = arith.constant 0 : i32
    %c0_i32_1 = arith.constant 0 : i32
    return %arg0, %c0_i32, %c0_i32_0 : i32, i32, i32
  }
  func.func @transform_1(%arg0: i32) -> (i32, i32, i32) {
    %c0_i32 = arith.constant 0 : i32
    %c0_i32_0 = arith.constant 0 : i32
    %c0_i32_1 = arith.constant 0 : i32
    %c0_i32_2 = arith.constant 0 : i32
    return %c0_i32, %c0_i32_0, %c0_i32_1 : i32, i32, i32
  }
  func.func @transform_2(%arg0: i32) -> (i32, i32, i32) {
    %c0_i32 = arith.constant 0 : i32
    %c0_i32_0 = arith.constant 0 : i32
    %c0_i32_1 = arith.constant 0 : i32
    return %arg0, %c0_i32, %c0_i32_0 : i32, i32, i32
  }
}

</mosaic_0001>

<llo_original>
// kernel: tpu_custom_call.1
$region0: #{tpu_custom_call.1}
  #allocation0 [shape = 'u32[]', space=smem, size = 0x4, offset = 0x4, fixed_abs, tag = 'smem constant byte address 0x4 - core index']
  #allocation1 [shape = 'u32[144,128]{1,0:T(1,128)}', space=vmem, size = 0x12000, scoped, tag = 'internal scratch']
  #allocation2 [shape = 'f32[18,64]{1,0:T(8,128)}', space=vmem, size = 0x3000, scoped, tag = 'scratch operand']
  %s0 = inlined_call_operand.hbm [shape: f32[2,16,64], index: 0, kind: input, shape index: {}]
  %s1 = inlined_call_operand.hbm [shape: f32[3,64,128], index: 1, kind: input, shape index: {}]
  %s2 = inlined_call_operand.hbm [shape: f32[2,16,128], index: 2, kind: output, shape index: {}]
  %s3 = sld [smem:[#allocation0]]
  $region49: #{tpu_custom_call.1} parent=0
    _
  %s5 = ssub.s32 1, %s3
  %s6 = scalar_select 0, %s5, %s3
  $region1: #{tpu_custom_call.1} parent=0
    #allocation3 [shape = 'u8[16384]{0}', space=vmem, size = 0x4000, scoped, tag = 'input window, operand 0']
    #allocation4 [shape = 's32[2]{0}', space=sflag, size = 0x8, scoped, tag = 'scoped memory for tpu_custom_call.1']
    #allocation5 [shape = 's32[2]{0}', space=sflag, size = 0x8, scoped, tag = 'scoped memory for tpu_custom_call.1']
    #allocation6 [shape = 'u8[98304]{0}', space=vmem, size = 0x18000, scoped, tag = 'input window, operand 1, single buffered']
    #allocation7 [shape = 's32[1]{0}', space=sflag, size = 0x4, scoped, tag = 'scoped memory for tpu_custom_call.1']
    #allocation8 [shape = 'u8[16384]{0}', space=vmem, size = 0x4000, scoped, tag = 'output window, operand 0']
    %7 = vsyncpa [#allocation4], 0
    %s8 = scalar_lea.sflag [#allocation4], 1
    %9 = vsyncpa %s8, 0
    %10 = vsyncpa [#allocation7], 0
    %11 = vsyncpa [#allocation5], 0
    %s12 = scalar_lea.sflag [#allocation5], 1
    %13 = vsyncpa %s12, 0
    loop: start=0, step=1, limit=4
    $region2: #{tpu_custom_call.1} parent=1 // loop_pre_header
      _
    $region3: #{tpu_custom_call.1} parent=1 // loop_header
      %s15 = sphi 0, %s19
      %p16 = scmp.ge.s32.totalorder %s15, 4
      %s25 = sphi 0, %s27
      %s28 = sphi 0, %s25
      %s29 = sphi 0, %s28
      %s45 = sphi 0, %s29
      %s49 = sphi 0, %s49
      %s51 = sphi 0, %s49
      %s52 = sphi 0, %s51
      %s66 = sphi 0, %s52
      %s72 = sphi 0, %s74
      %s75 = sphi 0, %s72
      %s76 = sphi 0, %s75
      %s92 = sphi 0, %s76
    $region4: #{tpu_custom_call.1} parent=1 // loop_header_branch
      %18 = sbr.rel (%p16) target = $region8
    $region5: #{tpu_custom_call.1} parent=1 // loop_body
      %s20 = ssub.s32 %s15, 1
      %s21 = ssub.s32 %s15, 2
      %s22 = sadd.s32 %s15, 1
      %s23 = ssub.s32 %s15, %s22
      %p24 = scmp.eq.s32.totalorder %s23, 0
      %s26 = sadd.s32 %s25, 1
      %s27 = scalar_select %p24, %s25, %s26
      %p30 = pneg %p24
      %p31 = scmp.eq.s32.totalorder %s15, 1
      %p32 = por %p30, %p31
      %p33 = scmp.ne.s32.totalorder %s25, %s28
      %p34 = scmp.eq.s32.totalorder %s15, 0
      %p35 = por %p33, %p34
      %p36 = scmp.ne.s32.totalorder %s25, %s28
      %p37 = scmp.eq.s32.totalorder %s20, 1
      %p38 = por %p36, %p37
      %p39 = scmp.ne.s32.totalorder %s28, %s29
      %p40 = scmp.eq.s32.totalorder %s20, 0
      %p41 = por %p39, %p40
      %p42 = scmp.ne.s32.totalorder %s28, %s29
      %p43 = scmp.eq.s32.totalorder %s21, 1
      %p44 = por %p42, %p43
      %p46 = scmp.ne.s32.totalorder %s29, %s45
      %p47 = scmp.eq.s32.totalorder %s21, 0
      %p48 = por %p46, %p47
      %s50 = sadd.s32 %s49, 1
      %p53 = scmp.eq.s32.totalorder %s15, 1
      %p54 = scmp.ne.s32.totalorder %s49, %s51
      %p55 = scmp.eq.s32.totalorder %s15, 0
      %p56 = por %p54, %p55
      %p57 = scmp.ne.s32.totalorder %s49, %s51
      %p58 = scmp.eq.s32.totalorder %s20, 1
      %p59 = por %p57, %p58
      %p60 = scmp.ne.s32.totalorder %s51, %s52
      %p61 = scmp.eq.s32.totalorder %s20, 0
      %p62 = por %p60, %p61
      %p63 = scmp.ne.s32.totalorder %s51, %s52
      %p64 = scmp.eq.s32.totalorder %s21, 1
      %p65 = por %p63, %p64
      %p67 = scmp.ne.s32.totalorder %s52, %s66
      %p68 = scmp.eq.s32.totalorder %s21, 0
      %p69 = por %p67, %p68
      %s70 = ssub.s32 %s15, %s22
      %p71 = scmp.eq.s32.totalorder %s70, 0
      %s73 = sadd.s32 %s72, 1
      %s74 = scalar_select %p71, %s72, %s73
      %p77 = pneg %p71
      %p78 = scmp.eq.s32.totalorder %s15, 1
      %p79 = por %p77, %p78
      %p80 = scmp.ne.s32.totalorder %s72, %s75
      %p81 = scmp.eq.s32.totalorder %s15, 0
      %p82 = por %p80, %p81
      %p83 = scmp.ne.s32.totalorder %s72, %s75
      %p84 = scmp.eq.s32.totalorder %s20, 1
      %p85 = por %p83, %p84
      %p86 = scmp.ne.s32.totalorder %s75, %s76
      %p87 = scmp.eq.s32.totalorder %s20, 0
      %p88 = por %p86, %p87
      %p89 = scmp.ne.s32.totalorder %s75, %s76
      %p90 = scmp.eq.s32.totalorder %s21, 1
      %p91 = por %p89, %p90
      %p93 = scmp.ne.s32.totalorder %s76, %s92
      %p94 = scmp.eq.s32.totalorder %s21, 0
      %p95 = por %p93, %p94
      %p96 = scmp.le.s32.totalorder 1, %s15
      %p97 = scmp.lt.s32.totalorder %s15, 3
      %p98 = pnand %p96, %p97
      %p99 = pneg %p98
      // Predicated region
      $region9: #{tpu_custom_call.1} parent=5 // pred_check
        _
      $region10: #{tpu_custom_call.1} parent=5 // pred_check_branch
        %101 = sbr.rel (%p98) target = $region12
      $region11: #{tpu_custom_call.1} parent=5 // pred_region
        %s102 = ssub.s32 %s15, 1
        // Predicated region
        $region13: #{tpu_custom_call.1} parent=11 // pred_check
          %p103 = pneg %p62
        $region14: #{tpu_custom_call.1} parent=11 // pred_check_branch
          %105 = sbr.rel (%p103) target = $region16
        $region15: #{tpu_custom_call.1} parent=11 // pred_region
          %s107 = ssub.s32 3072, 3072
          %108 = vsyncadd [#allocation7], %s107
          %s109 = sshll.u32 [#allocation6], 4
          %s110 = int_to_ptr.vmem [resolvable:$true] %s109
          %115 = dma.hbm_to_vmem [thread:$0]  %s1, 3072, %s110, [#allocation7], 128, 128, 8
        $region16: #{tpu_custom_call.1} parent=11 // pred_fallthru
          _
      $region12: #{tpu_custom_call.1} parent=5 // pred_fallthru
        _
      %p116 = scmp.lt.s32.totalorder %s15, 2
      // Predicated region
      $region17: #{tpu_custom_call.1} parent=5 // pred_check
        %p117 = pneg %p116
      $region18: #{tpu_custom_call.1} parent=5 // pred_check_branch
        %119 = sbr.rel (%p117) target = $region20
      $region19: #{tpu_custom_call.1} parent=5 // pred_region
        // Predicated region
        $region21: #{tpu_custom_call.1} parent=19 // pred_check
          %p120 = pneg %p35
        $region22: #{tpu_custom_call.1} parent=19 // pred_check_branch
          %122 = sbr.rel (%p120) target = $region24
        $region23: #{tpu_custom_call.1} parent=19 // pred_region
          %s123 = sand.u32 %s25, 1
          %s124 = scalar_lea.sflag [#allocation4], %s123
          %s125 = sand.u32 %s25, 1
          %s126 = smul.addr %s125, 16
          %s127 = scalar_lea.vmem [#allocation3], %s126
          %s129 = ssub.s32 256, 256
          %130 = vsyncadd %s124, %s129
          %s131 = smul.addr %s15, 2
          %s132 = smul.addr %s131, 128
          %s133 = scalar_lea.hbm %s0, %s132
          %s134 = sshll.u32 %s127, 4
          %s135 = int_to_ptr.vmem [resolvable:$true] %s134
          %140 = dma.hbm_to_vmem [thread:$0]  %s133, 256, %s135, %s124, 128, 128, 8
        $region24: #{tpu_custom_call.1} parent=19 // pred_fallthru
          _
      $region20: #{tpu_custom_call.1} parent=5 // pred_fallthru
        _
      %p141 = scmp.le.s32.totalorder 1, %s15
      %p142 = scmp.lt.s32.totalorder %s15, 3
      %p143 = pnand %p141, %p142
      %p144 = pneg %p143
      // Predicated region
      $region25: #{tpu_custom_call.1} parent=5 // pred_check
        _
      $region26: #{tpu_custom_call.1} parent=5 // pred_check_branch
        %146 = sbr.rel (%p143) target = $region28
      $region27: #{tpu_custom_call.1} parent=5 // pred_region
        %s147 = ssub.s32 %s15, 1
        %s148 = sand.u32 %s28, 1
        %s149 = scalar_lea.sflag [#allocation4], %s148
        %s150 = sand.u32 %s28, 1
        %s151 = smul.addr %s150, 16
        %s152 = scalar_lea.vmem [#allocation3], %s151
        // Predicated region
        $region29: #{tpu_custom_call.1} parent=27 // pred_check
          %p153 = pneg %p41
        $region30: #{tpu_custom_call.1} parent=27 // pred_check_branch
          %155 = sbr.rel (%p153) target = $region32
        $region31: #{tpu_custom_call.1} parent=27 // pred_region
          %156 = dma.done %s149, 256
        $region32: #{tpu_custom_call.1} parent=27 // pred_fallthru
          _
        // Predicated region
        $region33: #{tpu_custom_call.1} parent=27 // pred_check
          %p157 = pneg %p62
        $region34: #{tpu_custom_call.1} parent=27 // pred_check_branch
          %159 = sbr.rel (%p157) target = $region36
        $region35: #{tpu_custom_call.1} parent=27 // pred_region
          %160 = dma.done [#allocation7], 3072
        $region36: #{tpu_custom_call.1} parent=27 // pred_fallthru
          _
        %s161 = sand.u32 %s28, 1
        %s162 = scalar_lea.sflag [#allocation4], %s161
        %s163 = sand.u32 %s28, 1
        %s164 = smul.addr %s163, 16
        %s165 = scalar_lea.vmem [#allocation3], %s164
        %p166 = pneg %p41
        %p167 = pneg %p38
        %p168 = pneg %p62
        %p169 = pneg %p59
        %p170 = pneg %p88
        %p171 = pneg %p85
        %s172 = sand.u32 %s75, 1
        %s173 = scalar_lea.sflag [#allocation5], %s172
        %s174 = sand.u32 %s75, 1
        %s175 = smul.addr %s174, 16
        %s176 = scalar_lea.vmem [#allocation8], %s175
        %v177 = vld [vmem:[%s152] sm:$0xff]
        %v178 = vld [vmem:[%s152 + $0x8] sm:$0xff]
        %s179 = scalar_lea.vmem [#allocation6], 64
        %v180 = vld [vmem:[%s179] sm:$0xff]
        %v181 = vld [vmem:[%s179 + $0x8] sm:$0xff]
        %v182 = vld [vmem:[%s179 + $0x10] sm:$0xff]
        %v183 = vld [vmem:[%s179 + $0x18] sm:$0xff]
        %v184 = vld [vmem:[%s179 + $0x20] sm:$0xff]
        %v185 = vld [vmem:[%s179 + $0x28] sm:$0xff]
        %v186 = vld [vmem:[%s179 + $0x30] sm:$0xff]
        %v187 = vld [vmem:[%s179 + $0x38] sm:$0xff]
        %vm188 = vcmask 516096
        %189 = vst.msk [vmem:[#allocation2] sm:$0x1] %vm188, 0.0
        %190 = vst.msk [vmem:[#allocation2 + $0x11] sm:$0x1] %vm188, 0.0
        %vm191 = vcmask 523264
        %192 = vst.msk [vmem:[#allocation2 + $0x1] sm:$0xff] %vm191, %v177
        %193 = vst.msk [vmem:[#allocation2 + $0x9] sm:$0xff] %vm191, %v178
        %v194 = vld [vmem:[#allocation2] sm:$0xff]
        %v195 = vld [vmem:[#allocation2 + $0x8] sm:$0xff]
        %v196 = vld [vmem:[#allocation6] sm:$0xff]
        %v197 = vld [vmem:[#allocation6 + $0x8] sm:$0xff]
        %v198 = vld [vmem:[#allocation6 + $0x10] sm:$0xff]
        %v199 = vld [vmem:[#allocation6 + $0x18] sm:$0xff]
        %v200 = vld [vmem:[#allocation6 + $0x20] sm:$0xff]
        %v201 = vld [vmem:[#allocation6 + $0x28] sm:$0xff]
        %v202 = vld [vmem:[#allocation6 + $0x30] sm:$0xff]
        %v203 = vld [vmem:[#allocation6 + $0x38] sm:$0xff]
        %v205 = vsel %vm191, %v194, 0
        %v208 = vsel %vm191, %v195, 0
        %210 = vmatprep.subr.mxu0 0.0
        %211 = vmatpush1.msra.mxu0 0.0
        %212 = vmatprep.subr.mxu0 0.0
        %213 = vmatpush1.msra.mxu0 0.0
        %214 = vmatprep.subr.mxu0 0.0
        %215 = vmatpush1.msra.mxu0 0.0
        %216 = vmatprep.subr.mxu0 0.0
        %217 = vmatpush1.msra.mxu0 0.0
        %218 = vmatprep.subr.mxu0 0.0
        %219 = vmatpush1.msra.mxu0 0.0
        %220 = vmatprep.subr.mxu0 0.0
        %221 = vmatpush1.msra.mxu0 0.0
        %222 = vmatprep.subr.mxu0 0.0
        %223 = vmatpush1.msra.mxu0 0.0
        %224 = vmatprep.subr.mxu0 0.0
        %225 = vmatpush1.msra.mxu0 0.0
        %226 = vmatprep.subr.mxu0 0.0
        %227 = vmatpush1.msra.mxu0 %v203
        %228 = vmatprep.subr.mxu0 0.0
        %229 = vmatpush1.msra.mxu0 %v202
        %230 = vmatprep.subr.mxu0 0.0
        %231 = vmatpush1.msra.mxu0 %v201
        %232 = vmatprep.subr.mxu0 0.0
        %233 = vmatpush1.msra.mxu0 %v200
        %234 = vmatprep.subr.mxu0 0.0
        %235 = vmatpush1.msra.mxu0 %v199
        %236 = vmatprep.subr.mxu0 0.0
        %237 = vmatpush1.msra.mxu0 %v198
        %238 = vmatprep.subr.mxu0 0.0
        %239 = vmatpush1.msra.mxu0 %v197
        %240 = vmatprep.subr.mxu0 0.0
        %241 = vmatpush1.msra.mxu0 %v196
        %242 = vmatprep.subr.mxu0 0.0
        %243 = vmatpush2.msra.mxu0 0.0
        %244 = vmatprep.subr.mxu0 0.0
        %245 = vmatpush2.msra.mxu0 0.0
        %246 = vmatprep.subr.mxu0 0.0
        %247 = vmatpush2.msra.mxu0 0.0
        %248 = vmatprep.subr.mxu0 0.0
        %249 = vmatpush2.msra.mxu0 0.0
        %250 = vmatprep.subr.mxu0 0.0
        %251 = vmatpush2.msra.mxu0 0.0
        %252 = vmatprep.subr.mxu0 0.0
        %253 = vmatpush2.msra.mxu0 0.0
        %254 = vmatprep.subr.mxu0 0.0
        %255 = vmatpush2.msra.mxu0 0.0
        %256 = vmatprep.subr.mxu0 0.0
        %257 = vmatpush2.msra.mxu0 0.0
        %258 = vmatprep.subr.mxu0 0.0
        %259 = vmatpush2.msra.mxu0 0.0
        %260 = vmatprep.subr.mxu0 0.0
        %261 = vmatpush2.msra.mxu0 0.0
        %262 = vmatprep.subr.mxu0 0.0
        %263 = vmatpush2.msra.mxu0 0.0
        %264 = vmatprep.subr.mxu0 0.0
        %265 = vmatpush2.msra.mxu0 0.0
        %266 = vmatprep.subr.mxu0 0.0
        %267 = vmatpush2.msra.mxu0 0.0
        %268 = vmatprep.subr.mxu0 0.0
        %269 = vmatpush2.msra.mxu0 0.0
        %270 = vmatprep.subr.mxu0 0.0
        %271 = vmatpush2.msra.mxu0 0.0
        %272 = vmatprep.subr.mxu0 0.0
        %273 = vmatpush2.msra.mxu0 0.0
        %274 = vmatprep.mubr.f32.mxu0 0.0
        %275 = vmatmul.mubr.f32.gmra.mxu0 %v205
        %v276 = vpop.f32.mrf.mxu0
        %v277 = vadd.f32 0.0, %v276
        %v278 = vpop.f32.mrf.mxu0
        %279 = vmatprep.mubr.f32.mxu0 0.0
        %280 = vmatmul.mubr.f32.gmra.mxu0 %v208
        %v281 = vpop.f32.mrf.mxu0
        %v282 = vadd.f32 0.0, %v281
        %v283 = vpop.f32.mrf.mxu0
        %284 = vdwg.mxu0
        %v286 = vsel %vm191, %v177, 0
        %v289 = vsel %vm191, %v178, 0
        %291 = vmatprep.subr.mxu0 0.0
        %292 = vmatpush1.msra.mxu0 0.0
        %293 = vmatprep.subr.mxu0 0.0
        %294 = vmatpush1.msra.mxu0 0.0
        %295 = vmatprep.subr.mxu0 0.0
        %296 = vmatpush1.msra.mxu0 0.0
        %297 = vmatprep.subr.mxu0 0.0
        %298 = vmatpush1.msra.mxu0 0.0
        %299 = vmatprep.subr.mxu0 0.0
        %300 = vmatpush1.msra.mxu0 0.0
        %301 = vmatprep.subr.mxu0 0.0
        %302 = vmatpush1.msra.mxu0 0.0
        %303 = vmatprep.subr.mxu0 0.0
        %304 = vmatpush1.msra.mxu0 0.0
        %305 = vmatprep.subr.mxu0 0.0
        %306 = vmatpush1.msra.mxu0 0.0
        %307 = vmatprep.subr.mxu0 0.0
        %308 = vmatpush1.msra.mxu0 %v187
        %309 = vmatprep.subr.mxu0 0.0
        %310 = vmatpush1.msra.mxu0 %v186
        %311 = vmatprep.subr.mxu0 0.0
        %312 = vmatpush1.msra.mxu0 %v185
        %313 = vmatprep.subr.mxu0 0.0
        %314 = vmatpush1.msra.mxu0 %v184
        %315 = vmatprep.subr.mxu0 0.0
        %316 = vmatpush1.msra.mxu0 %v183
        %317 = vmatprep.subr.mxu0 0.0
        %318 = vmatpush1.msra.mxu0 %v182
        %319 = vmatprep.subr.mxu0 0.0
        %320 = vmatpush1.msra.mxu0 %v181
        %321 = vmatprep.subr.mxu0 0.0
        %322 = vmatpush1.msra.mxu0 %v180
        %323 = vmatprep.subr.mxu0 0.0
        %324 = vmatpush2.msra.mxu0 0.0
        %325 = vmatprep.subr.mxu0 0.0
        %326 = vmatpush2.msra.mxu0 0.0
        %327 = vmatprep.subr.mxu0 0.0
        %328 = vmatpush2.msra.mxu0 0.0
        %329 = vmatprep.subr.mxu0 0.0
        %330 = vmatpush2.msra.mxu0 0.0
        %331 = vmatprep.subr.mxu0 0.0
        %332 = vmatpush2.msra.mxu0 0.0
        %333 = vmatprep.subr.mxu0 0.0
        %334 = vmatpush2.msra.mxu0 0.0
        %335 = vmatprep.subr.mxu0 0.0
        %336 = vmatpush2.msra.mxu0 0.0
        %337 = vmatprep.subr.mxu0 0.0
        %338 = vmatpush2.msra.mxu0 0.0
        %339 = vmatprep.subr.mxu0 0.0
        %340 = vmatpush2.msra.mxu0 0.0
        %341 = vmatprep.subr.mxu0 0.0
        %342 = vmatpush2.msra.mxu0 0.0
        %343 = vmatprep.subr.mxu0 0.0
        %344 = vmatpush2.msra.mxu0 0.0
        %345 = vmatprep.subr.mxu0 0.0
        %346 = vmatpush2.msra.mxu0 0.0
        %347 = vmatprep.subr.mxu0 0.0
        %348 = vmatpush2.msra.mxu0 0.0
        %349 = vmatprep.subr.mxu0 0.0
        %350 = vmatpush2.msra.mxu0 0.0
        %351 = vmatprep.subr.mxu0 0.0
        %352 = vmatpush2.msra.mxu0 0.0
        %353 = vmatprep.subr.mxu0 0.0
        %354 = vmatpush2.msra.mxu0 0.0
        %355 = vmatprep.mubr.f32.mxu0 0.0
        %356 = vmatmul.mubr.f32.gmra.mxu0 %v286
        %v357 = vpop.f32.mrf.mxu0
        %v358 = vadd.f32 %v277, %v357
        %v359 = vpop.f32.mrf.mxu0
        %360 = vmatprep.mubr.f32.mxu0 0.0
        %361 = vmatmul.mubr.f32.gmra.mxu0 %v289
        %v362 = vpop.f32.mrf.mxu0
        %v363 = vadd.f32 %v282, %v362
        %v364 = vpop.f32.mrf.mxu0
        %365 = vdwg.mxu0
        %v366 = vld [vmem:[#allocation2 + $0x2] sm:$0xff]
        %v367 = vld [vmem:[#allocation2 + $0xa] sm:$0xff]
        %s368 = scalar_lea.vmem [#allocation6], 128
        %v369 = vld [vmem:[%s368] sm:$0xff]
        %v370 = vld [vmem:[%s368 + $0x8] sm:$0xff]
        %v371 = vld [vmem:[%s368 + $0x10] sm:$0xff]
        %v372 = vld [vmem:[%s368 + $0x18] sm:$0xff]
        %v373 = vld [vmem:[%s368 + $0x20] sm:$0xff]
        %v374 = vld [vmem:[%s368 + $0x28] sm:$0xff]
        %v375 = vld [vmem:[%s368 + $0x30] sm:$0xff]
        %v376 = vld [vmem:[%s368 + $0x38] sm:$0xff]
        %v378 = vsel %vm191, %v366, 0
        %v381 = vsel %vm191, %v367, 0
        %383 = vmatprep.subr.mxu0 0.0
        %384 = vmatpush1.msra.mxu0 0.0
        %385 = vmatprep.subr.mxu0 0.0
        %386 = vmatpush1.msra.mxu0 0.0
        %387 = vmatprep.subr.mxu0 0.0
        %388 = vmatpush1.msra.mxu0 0.0
        %389 = vmatprep.subr.mxu0 0.0
        %390 = vmatpush1.msra.mxu0 0.0
        %391 = vmatprep.subr.mxu0 0.0
        %392 = vmatpush1.msra.mxu0 0.0
        %393 = vmatprep.subr.mxu0 0.0
        %394 = vmatpush1.msra.mxu0 0.0
        %395 = vmatprep.subr.mxu0 0.0
        %396 = vmatpush1.msra.mxu0 0.0
        %397 = vmatprep.subr.mxu0 0.0
        %398 = vmatpush1.msra.mxu0 0.0
        %399 = vmatprep.subr.mxu0 0.0
        %400 = vmatpush1.msra.mxu0 %v376
        %401 = vmatprep.subr.mxu0 0.0
        %402 = vmatpush1.msra.mxu0 %v375
        %403 = vmatprep.subr.mxu0 0.0
        %404 = vmatpush1.msra.mxu0 %v374
        %405 = vmatprep.subr.mxu0 0.0
        %406 = vmatpush1.msra.mxu0 %v373
        %407 = vmatprep.subr.mxu0 0.0
        %408 = vmatpush1.msra.mxu0 %v372
        %409 = vmatprep.subr.mxu0 0.0
        %410 = vmatpush1.msra.mxu0 %v371
        %411 = vmatprep.subr.mxu0 0.0
        %412 = vmatpush1.msra.mxu0 %v370
        %413 = vmatprep.subr.mxu0 0.0
        %414 = vmatpush1.msra.mxu0 %v369
        %415 = vmatprep.subr.mxu0 0.0
        %416 = vmatpush2.msra.mxu0 0.0
        %417 = vmatprep.subr.mxu0 0.0
        %418 = vmatpush2.msra.mxu0 0.0
        %419 = vmatprep.subr.mxu0 0.0
        %420 = vmatpush2.msra.mxu0 0.0
        %421 = vmatprep.subr.mxu0 0.0
        %422 = vmatpush2.msra.mxu0 0.0
        %423 = vmatprep.subr.mxu0 0.0
        %424 = vmatpush2.msra.mxu0 0.0
        %425 = vmatprep.subr.mxu0 0.0
        %426 = vmatpush2.msra.mxu0 0.0
        %427 = vmatprep.subr.mxu0 0.0
        %428 = vmatpush2.msra.mxu0 0.0
        %429 = vmatprep.subr.mxu0 0.0
        %430 = vmatpush2.msra.mxu0 0.0
        %431 = vmatprep.subr.mxu0 0.0
        %432 = vmatpush2.msra.mxu0 0.0
        %433 = vmatprep.subr.mxu0 0.0
        %434 = vmatpush2.msra.mxu0 0.0
        %435 = vmatprep.subr.mxu0 0.0
        %436 = vmatpush2.msra.mxu0 0.0
        %437 = vmatprep.subr.mxu0 0.0
        %438 = vmatpush2.msra.mxu0 0.0
        %439 = vmatprep.subr.mxu0 0.0
        %440 = vmatpush2.msra.mxu0 0.0
        %441 = vmatprep.subr.mxu0 0.0
        %442 = vmatpush2.msra.mxu0 0.0
        %443 = vmatprep.subr.mxu0 0.0
        %444 = vmatpush2.msra.mxu0 0.0
        %445 = vmatprep.subr.mxu0 0.0
        %446 = vmatpush2.msra.mxu0 0.0
        %447 = vmatprep.mubr.f32.mxu0 0.0
        %448 = vmatmul.mubr.f32.gmra.mxu0 %v378
        %v449 = vpop.f32.mrf.mxu0
        %v450 = vadd.f32 0.0, %v449
        %v451 = vpop.f32.mrf.mxu0
        %452 = vmatprep.mubr.f32.mxu0 0.0
        %453 = vmatmul.mubr.f32.gmra.mxu0 %v381
        %v454 = vpop.f32.mrf.mxu0
        %v455 = vadd.f32 0.0, %v454
        %v456 = vpop.f32.mrf.mxu0
        %457 = vdwg.mxu0
        %v458 = vadd.f32 %v358, %v450
        %v459 = vadd.f32 %v363, %v455
        %460 = vst [vmem:[%s176] sm:$0xff] %v458
        %461 = vst [vmem:[%s176 + $0x8] sm:$0xff] %v459
        %s462 = sand.u32 %s75, 1
        %s463 = scalar_lea.sflag [#allocation5], %s462
        %s464 = sand.u32 %s75, 1
        %s465 = smul.addr %s464, 16
        %s466 = scalar_lea.vmem [#allocation8], %s465
        // Predicated region
        $region37: #{tpu_custom_call.1} parent=27 // pred_check
          %p467 = pneg %p85
        $region38: #{tpu_custom_call.1} parent=27 // pred_check_branch
          %469 = sbr.rel (%p467) target = $region40
        $region39: #{tpu_custom_call.1} parent=27 // pred_region
          %s471 = ssub.s32 256, 256
          %472 = vsyncadd %s463, %s471
          %s473 = smul.addr %s20, 2
          %s474 = smul.addr %s473, 128
          %s475 = scalar_lea.hbm %s2, %s474
          %s476 = sshll.u32 %s466, 4
          %s477 = int_to_ptr.vmem [resolvable:$true] %s476
          %482 = dma.vmem_to_hbm [thread:$0]  %s477, 256, %s475, %s463, 128, 128, 8
        $region40: #{tpu_custom_call.1} parent=27 // pred_fallthru
          _
      $region28: #{tpu_custom_call.1} parent=5 // pred_fallthru
        _
      %p483 = scmp.le.s32.totalorder 2, %s15
      // Predicated region
      $region41: #{tpu_custom_call.1} parent=5 // pred_check
        %p484 = pneg %p483
      $region42: #{tpu_custom_call.1} parent=5 // pred_check_branch
        %486 = sbr.rel (%p484) target = $region44
      $region43: #{tpu_custom_call.1} parent=5 // pred_region
        %s487 = ssub.s32 %s15, 2
        // Predicated region
        $region45: #{tpu_custom_call.1} parent=43 // pred_check
          %p488 = pneg %p91
        $region46: #{tpu_custom_call.1} parent=43 // pred_check_branch
          %490 = sbr.rel (%p488) target = $region48
        $region47: #{tpu_custom_call.1} parent=43 // pred_region
          %s491 = sand.u32 %s76, 1
          %s492 = scalar_lea.sflag [#allocation5], %s491
          %s493 = sand.u32 %s76, 1
          %s494 = smul.addr %s493, 16
          %s495 = scalar_lea.vmem [#allocation8], %s494
          %496 = dma.done %s492, 256
        $region48: #{tpu_custom_call.1} parent=43 // pred_fallthru
          _
      $region44: #{tpu_custom_call.1} parent=5 // pred_fallthru
        _
    $region6: #{tpu_custom_call.1} parent=1 // loop_footer
      %s19 = sadd.s32 1, %s15
    $region7: #{tpu_custom_call.1} parent=1 // loop_footer_branch
      %14 = sbr.rel target = $region3
    $region8: #{tpu_custom_call.1} parent=1 // loop_exit
      _
    %497 = vsyncpa [#allocation4], 1
    %s498 = scalar_lea.sflag [#allocation4], 1
    %499 = vsyncpa %s498, 1
    %500 = vsyncpa [#allocation7], 1
    %501 = vsyncpa [#allocation5], 1
    %s502 = scalar_lea.sflag [#allocation5], 1
    %503 = vsyncpa %s502, 1

</llo_original>
